<compile_context>
chip_gen: v7x
topology: tpu7x:2x2x1
jax: 0.10.0
libtpu: 0.0.40
codegen_flags: <defaults>
</compile_context>

<pallas_src>
import functools

import jax
import jax.numpy as jnp
from jax import lax
from jax.experimental import pallas as pl
from jax.experimental.pallas import tpu as pltpu


# ----------------------------------------------------------------------------
# Kernel 1: QKV projection (row-tiled, resident single-buffered weights).
# ----------------------------------------------------------------------------
def _qkv_proj_kernel(xq_ref, xk_ref, xv_ref,
                     wq_ref, wk_ref, wv_ref,
                     bq_ref, bk_ref, bv_ref,
                     q_out, k_out, v_out, *, q_scale, mxu_dtype):
    def proj(x_ref, w_ref, b_ref, out_ref, scale=None):
        acc = jnp.dot(x_ref[...].astype(mxu_dtype), w_ref[...],
                      preferred_element_type=jnp.float32)
        acc = acc + b_ref[...]
        if scale is not None:               # fold 1/sqrt(dh) into Q once per element
            acc = acc * scale
        out_ref[...] = acc.astype(out_ref.dtype)

    proj(xq_ref, wq_ref, bq_ref, q_out, q_scale)
    proj(xk_ref, wk_ref, bk_ref, k_out)
    proj(xv_ref, wv_ref, bv_ref, v_out)


# ----------------------------------------------------------------------------
# Kernel 2: flash-style attention with online softmax over KV tiles.
# grid = (B*H, num_q_tiles, num_kv_tiles); output block resident across the
# kv axis (accumulator pattern, init/finalize via pl.when).
# ----------------------------------------------------------------------------
def _flash_attn_kernel(q_ref, k_ref, v_ref, o_ref, m_sc, l_sc, acc_sc):
    ki = pl.program_id(2)

    @pl.when(ki == 0)
    def _():
        m_sc[...] = jnp.full(m_sc.shape, -jnp.inf, dtype=m_sc.dtype)
        l_sc[...] = jnp.zeros(l_sc.shape, dtype=l_sc.dtype)
        acc_sc[...] = jnp.zeros(acc_sc.shape, dtype=acc_sc.dtype)

    q = q_ref[0]                                # [TQ, dh] (already scaled)
    k = k_ref[0]                                # [TK, dh]
    # scores[s, t] = <q_s, k_t>  — contract the head dim directly, no transpose.
    s = lax.dot_general(q, k, (((1,), (1,)), ((), ())),
                        preferred_element_type=jnp.float32)       # [TQ, TK] f32

    m_prev = m_sc[...]
    m_new = jnp.maximum(m_prev, jnp.max(s, axis=-1, keepdims=True))
    alpha = jnp.exp(m_prev - m_new)                               # [TQ, 1]
    p = jnp.exp(s - m_new)                                        # [TQ, TK]
    l_sc[...] = alpha * l_sc[...] + jnp.sum(p, axis=-1, keepdims=True)
    acc_sc[...] = alpha * acc_sc[...] + jnp.dot(
        p.astype(v_ref.dtype), v_ref[0], preferred_element_type=jnp.float32)
    m_sc[...] = m_new

    # attention-probs dropout: identity (eval mode).
    # TODO(synk): training-mode dropout (pltpu.prng_random_bits mask) not emitted.

    @pl.when(ki == pl.num_programs(2) - 1)
    def _():
        inv_l = pl.reciprocal(l_sc[...], approx=True)   # EUP divide -> multiply
        o_ref[0] = (acc_sc[...] * inv_l).astype(o_ref.dtype)


# ----------------------------------------------------------------------------
# Helpers
# ----------------------------------------------------------------------------
def _pick_tile(n, target):
    """Largest multiple-of-8 divisor of n that is <= target (else n itself)."""
    if n <= target:
        return n
    t = (target // 8) * 8
    for cand in range(t, 7, -8):
        if n % cand == 0:
            return cand
    return n


def _vmem_cap_bytes():
    # Generation-aware cap: ~90% of physical VMEM (v5e/v6e: 128 MiB, v7x: 64 MiB).
    try:
        return int(0.9 * pltpu.get_tpu_info().vmem_capacity_bytes)
    except Exception:
        return 64 * 1024 * 1024     # conservative (v7x physical VMEM)


def _vmem_limit(estimate_bytes):
    cap = _vmem_cap_bytes()
    floor = min(32 * 1024 * 1024, cap)
    return max(min(int(1.5 * estimate_bytes), cap), floor)


# ----------------------------------------------------------------------------
# Wrapper
# ----------------------------------------------------------------------------
@functools.partial(jax.jit, static_argnames=("num_heads", "use_bf16_mxu"))
def multi_head_attention(q, k, v, wq, bq, wk, bk, wv, bv, *,
                         num_heads, use_bf16_mxu=True):
    """
    Args:
      q, k, v   : [batch, seq, model_dim]
      wq/wk/wv  : [model_dim, model_dim]   (pre-transposed vs. nn.Linear.weight)
      bq/bk/bv  : [model_dim]
      use_bf16_mxu: run MXU matmuls with bf16 operands when inputs are f32
        (f32 accumulation).  Documented precision trade-off; set False for
        full-f32 math.
    Returns:
      [batch, seq, model_dim]
    """
    B, S, D = q.shape
    if D % num_heads != 0:
        raise ValueError(f"model_dim {D} not divisible by num_heads {num_heads}")
    H = num_heads
    dh = D // H
    scale = 1.0 / float(dh) ** 0.5

    mxu_dtype = jnp.bfloat16 if (use_bf16_mxu and q.dtype == jnp.float32) else q.dtype
    mxu_isz = jnp.dtype(mxu_dtype).itemsize
    in_isz = jnp.dtype(q.dtype).itemsize

    # NOTE: q/k/v may be different tensors, so Wq|Wk|Wv cannot be packed into a
    # single [D, 3D] matmul in general (that optimization only applies to
    # self-attention where q is k is v).
    wq_c, wk_c, wv_c = (w.astype(mxu_dtype) for w in (wq, wk, wv))
    bq2, bk2, bv2 = (b.astype(jnp.float32).reshape(1, D) for b in (bq, bk, bv))

    # ---- 1) QKV projection --------------------------------------------------
    BS = B * S
    qf, kf, vf = (x.reshape(BS, D) for x in (q, k, v))
    TM = _pick_tile(BS, 256)

    proj_est = (3 * D * D * mxu_isz                 # single-buffered weights
                + 3 * D * 4                         # biases
                + 2 * 3 * TM * D * (in_isz + mxu_isz)   # dbl-buffered in/out tiles
                + 3 * TM * D * 4)                   # f32 accumulators
    # TODO(synk): for very large model_dim (e.g. D>=2048 on v7x) the resident
    # Wq/Wk/Wv no longer fit scoped VMEM; a K-tiled projection grid axis would
    # be required.

    row_spec = pl.BlockSpec((TM, D), lambda i: (i, 0))
    w_spec = pl.BlockSpec((D, D), lambda i: (0, 0),
                          pipeline_mode=pl.Buffered(buffer_count=1))
    b_spec = pl.BlockSpec((1, D), lambda i: (0, 0),
                          pipeline_mode=pl.Buffered(buffer_count=1))

    proj_kernel = functools.partial(_qkv_proj_kernel, q_scale=scale,
                                    mxu_dtype=mxu_dtype)
    qp, kp, vp = pl.pallas_call(
        proj_kernel,
        out_shape=[jax.ShapeDtypeStruct((BS, D), mxu_dtype)] * 3,
        grid_spec=pltpu.PrefetchScalarGridSpec(
            num_scalar_prefetch=0,
            grid=(BS // TM,),
            in_specs=[row_spec, row_spec, row_spec,
                      w_spec, w_spec, w_spec,
                      b_spec, b_spec, b_spec],
            out_specs=[row_spec, row_spec, row_spec]),
        compiler_params=pltpu.CompilerParams(
            dimension_semantics=("parallel",),
            vmem_limit_bytes=_vmem_limit(proj_est)),
    )(qf, kf, vf, wq_c, wk_c, wv_c, bq2, bk2, bv2)

    # ---- head-major layout (mirrors transpose_for_scores) -------------------
    def split_heads(x):
        return x.reshape(B, S, H, dh).transpose(0, 2, 1, 3).reshape(B * H, S, dh)

    qh, kh, vh = split_heads(qp), split_heads(kp), split_heads(vp)

    # ---- 2) flash attention --------------------------------------------------
    TQ = _pick_tile(S, 256)
    TK = _pick_tile(S, 256)
    attn_est = (2 * (TQ + 2 * TK) * dh * mxu_isz    # dbl-buffered q/k/v tiles
                + 2 * TQ * dh * in_isz              # dbl-buffered output tile
                + (2 * TQ + TQ * dh) * 4            # m/l/acc scratch
                + 3 * TQ * TK * 4)                  # scores/exp temporaries (one head)

    ctx = pl.pallas_call(
        _flash_attn_kernel,
        out_shape=jax.ShapeDtypeStruct((B * H, S, dh), q.dtype),
        grid_spec=pltpu.PrefetchScalarGridSpec(
            num_scalar_prefetch=0,
            grid=(B * H, S // TQ, S // TK),
            in_specs=[pl.BlockSpec((1, TQ, dh), lambda bh, qi, ki: (bh, qi, 0)),
                      pl.BlockSpec((1, TK, dh), lambda bh, qi, ki: (bh, ki, 0)),
                      pl.BlockSpec((1, TK, dh), lambda bh, qi, ki: (bh, ki, 0))],
            out_specs=pl.BlockSpec((1, TQ, dh), lambda bh, qi, ki: (bh, qi, 0)),
            scratch_shapes=[pltpu.VMEM((TQ, 1), jnp.float32),
                            pltpu.VMEM((TQ, 1), jnp.float32),
                            pltpu.VMEM((TQ, dh), jnp.float32)]),
        compiler_params=pltpu.CompilerParams(
            dimension_semantics=("parallel", "parallel", "arbitrary"),
            vmem_limit_bytes=_vmem_limit(attn_est)),
    )(qh, kh, vh)

    # merge heads: [B*H, S, dh] -> [B, S, D]
    return ctx.reshape(B, H, S, dh).transpose(0, 2, 1, 3).reshape(B, S, D)


# ----------------------------------------------------------------------------
# Pure-JAX reference (HIGHEST precision)
# ----------------------------------------------------------------------------
def _reference(q, k, v, wq, bq, wk, bk, wv, bv, num_heads):
    B, S, D = q.shape
    dh = D // num_heads
    hp = jax.lax.Precision.HIGHEST

    def proj(x, w, b):
        return jnp.matmul(x, w, precision=hp) + b

    def split(x):
        return x.reshape(B, S, num_heads, dh).transpose(0, 2, 1, 3)

    Q = split(proj(q, wq, bq))
    K = split(proj(k, wk, bk))
    V = split(proj(v, wv, bv))
    scores = jnp.einsum("bhqd,bhkd->bhqk", Q, K, precision=hp) / dh ** 0.5
    probs = jax.nn.softmax(scores, axis=-1)
    ctx = jnp.einsum("bhqk,bhkd->bhqd", probs, V, precision=hp)
    return ctx.transpose(0, 2, 1, 3).reshape(B, S, D)


if __name__ == "__main__":
    # Small config consistent with the module: batch=2, seq=8, model_dim=32, heads=4
    B, S, D, H = 2, 8, 32, 4

    key = jax.random.PRNGKey(0)
    ks = jax.random.split(key, 9)

    query = jax.random.normal(ks[0], (B, S, D), dtype=jnp.float32)
    key_t = jax.random.normal(ks[1], (B, S, D), dtype=jnp.float32)
    value = jax.random.normal(ks[2], (B, S, D), dtype=jnp.float32)

    wscale = (1.0 / D) ** 0.5
    wq = jax.random.normal(ks[3], (D, D), dtype=jnp.float32) * wscale
    wk = jax.random.normal(ks[4], (D, D), dtype=jnp.float32) * wscale
    wv = jax.random.normal(ks[5], (D, D), dtype=jnp.float32) * wscale
    bq = jax.random.normal(ks[6], (D,), dtype=jnp.float32) * 0.01
    bk = jax.random.normal(ks[7], (D,), dtype=jnp.float32) * 0.01
    bv = jax.random.normal(ks[8], (D,), dtype=jnp.float32) * 0.01

    ref = _reference(query, key_t, value, wq, bq, wk, bk, wv, bv, H)

    # Full-f32 MXU path: tight correctness check.
    out_f32 = multi_head_attention(query, key_t, value, wq, bq, wk, bk, wv, bv,
                                   num_heads=H, use_bf16_mxu=False)
    out_f32 = jax.block_until_ready(out_f32)
    assert out_f32.shape == (B, S, D)
    assert jnp.allclose(out_f32, ref, atol=2e-2, rtol=2e-2), "f32 path mismatch"

    # Default bf16-MXU path (documented precision trade-off): looser check.
    out_bf16 = multi_head_attention(query, key_t, value, wq, bq, wk, bk, wv, bv,
                                    num_heads=H)
    out_bf16 = jax.block_until_ready(out_bf16)
    assert out_bf16.shape == (B, S, D)
    assert jnp.allclose(out_bf16, ref, atol=1e-1, rtol=1e-1), "bf16 path mismatch"

    print("KERNEL_OK")
</pallas_src>

<mosaic_0001>
module attributes {stable_mosaic.version = 11 : i64} {
  func.func @_qkv_proj_kernel(%arg0: i32, %arg1: memref<16x32xf32, #tpu.memory_space<vmem>>, %arg2: memref<16x32xf32, #tpu.memory_space<vmem>>, %arg3: memref<16x32xf32, #tpu.memory_space<vmem>>, %arg4: memref<32x32xf32, #tpu.memory_space<vmem>>, %arg5: memref<32x32xf32, #tpu.memory_space<vmem>>, %arg6: memref<32x32xf32, #tpu.memory_space<vmem>>, %arg7: memref<1x32xf32, #tpu.memory_space<vmem>>, %arg8: memref<1x32xf32, #tpu.memory_space<vmem>>, %arg9: memref<1x32xf32, #tpu.memory_space<vmem>>, %arg10: memref<16x32xf32, #tpu.memory_space<vmem>>, %arg11: memref<16x32xf32, #tpu.memory_space<vmem>>, %arg12: memref<16x32xf32, #tpu.memory_space<vmem>>) attributes {dimension_semantics = [#tpu.dimension_semantics<parallel>], iteration_bounds = array<i64: 1>, scalar_prefetch = 0 : i64, scratch_operands = 0 : i64, tpu.core_type = #tpu.core_type<tc>, window_params = [{transform_indices = @transform_0, window_bounds = array<i64: 16, 32>}, {transform_indices = @transform_1, window_bounds = array<i64: 16, 32>}, {transform_indices = @transform_2, window_bounds = array<i64: 16, 32>}, {pipeline_mode = #tpu.pipeline_mode<synchronous>, transform_indices = @transform_3, window_bounds = array<i64: 32, 32>}, {pipeline_mode = #tpu.pipeline_mode<synchronous>, transform_indices = @transform_4, window_bounds = array<i64: 32, 32>}, {pipeline_mode = #tpu.pipeline_mode<synchronous>, transform_indices = @transform_5, window_bounds = array<i64: 32, 32>}, {pipeline_mode = #tpu.pipeline_mode<synchronous>, transform_indices = @transform_6, window_bounds = array<i64: 1, 32>}, {pipeline_mode = #tpu.pipeline_mode<synchronous>, transform_indices = @transform_7, window_bounds = array<i64: 1, 32>}, {pipeline_mode = #tpu.pipeline_mode<synchronous>, transform_indices = @transform_8, window_bounds = array<i64: 1, 32>}, {transform_indices = @transform_9, window_bounds = array<i64: 16, 32>}, {transform_indices = @transform_10, window_bounds = array<i64: 16, 32>}, {transform_indices = @transform_11, window_bounds = array<i64: 16, 32>}]} {
    %c0 = arith.constant 0 : index
    %c0_0 = arith.constant 0 : index
    %0 = vector.load %arg1[%c0, %c0_0] : memref<16x32xf32, #tpu.memory_space<vmem>>, vector<16x32xf32>
    %c0_1 = arith.constant 0 : index
    %c0_2 = arith.constant 0 : index
    %1 = vector.load %arg4[%c0_1, %c0_2] : memref<32x32xf32, #tpu.memory_space<vmem>>, vector<32x32xf32>
    %cst = arith.constant dense<0.000000e+00> : vector<16x32xf32>
    %2 = tpu.matmul %0, %1, %cst {dimension_numbers = #tpu.dot_dimension_numbers<[1], [0], [0], [1], [0, 0, 1, 1], [], []>} : vector<16x32xf32>, vector<32x32xf32>, vector<16x32xf32> -> vector<16x32xf32>
    %c0_3 = arith.constant 0 : index
    %c0_4 = arith.constant 0 : index
    %3 = vector.load %arg7[%c0_3, %c0_4] : memref<1x32xf32, #tpu.memory_space<vmem>>, vector<1x32xf32>
    %4 = vector.broadcast %3 : vector<1x32xf32> to vector<16x32xf32>
    %5 = arith.addf %2, %4 : vector<16x32xf32>
    %cst_5 = arith.constant 0.353553385 : f32
    %6 = vector.broadcast %cst_5 : f32 to vector<16x32xf32>
    %7 = arith.mulf %5, %6 : vector<16x32xf32>
    %c0_6 = arith.constant 0 : index
    %c0_7 = arith.constant 0 : index
    %8 = vector.load %arg10[%c0_6, %c0_7] : memref<16x32xf32, #tpu.memory_space<vmem>>, vector<16x32xf32>
    tpu.vector_store %arg10[%c0_6, %c0_7], %7 {strides = array<i32>} : memref<16x32xf32, #tpu.memory_space<vmem>>, vector<16x32xf32>,
    %c0_8 = arith.constant 0 : index
    %c0_9 = arith.constant 0 : index
    %9 = vector.load %arg2[%c0_8, %c0_9] : memref<16x32xf32, #tpu.memory_space<vmem>>, vector<16x32xf32>
    %c0_10 = arith.constant 0 : index
    %c0_11 = arith.constant 0 : index
    %10 = vector.load %arg5[%c0_10, %c0_11] : memref<32x32xf32, #tpu.memory_space<vmem>>, vector<32x32xf32>
    %cst_12 = arith.constant dense<0.000000e+00> : vector<16x32xf32>
    %11 = tpu.matmul %9, %10, %cst_12 {dimension_numbers = #tpu.dot_dimension_numbers<[1], [0], [0], [1], [0, 0, 1, 1], [], []>} : vector<16x32xf32>, vector<32x32xf32>, vector<16x32xf32> -> vector<16x32xf32>
    %c0_13 = arith.constant 0 : index
    %c0_14 = arith.constant 0 : index
    %12 = vector.load %arg8[%c0_13, %c0_14] : memref<1x32xf32, #tpu.memory_space<vmem>>, vector<1x32xf32>
    %13 = vector.broadcast %12 : vector<1x32xf32> to vector<16x32xf32>
    %14 = arith.addf %11, %13 : vector<16x32xf32>
    %c0_15 = arith.constant 0 : index
    %c0_16 = arith.constant 0 : index
    %15 = vector.load %arg11[%c0_15, %c0_16] : memref<16x32xf32, #tpu.memory_space<vmem>>, vector<16x32xf32>
    tpu.vector_store %arg11[%c0_15, %c0_16], %14 {strides = array<i32>} : memref<16x32xf32, #tpu.memory_space<vmem>>, vector<16x32xf32>,
    %c0_17 = arith.constant 0 : index
    %c0_18 = arith.constant 0 : index
    %16 = vector.load %arg3[%c0_17, %c0_18] : memref<16x32xf32, #tpu.memory_space<vmem>>, vector<16x32xf32>
    %c0_19 = arith.constant 0 : index
    %c0_20 = arith.constant 0 : index
    %17 = vector.load %arg6[%c0_19, %c0_20] : memref<32x32xf32, #tpu.memory_space<vmem>>, vector<32x32xf32>
    %cst_21 = arith.constant dense<0.000000e+00> : vector<16x32xf32>
    %18 = tpu.matmul %16, %17, %cst_21 {dimension_numbers = #tpu.dot_dimension_numbers<[1], [0], [0], [1], [0, 0, 1, 1], [], []>} : vector<16x32xf32>, vector<32x32xf32>, vector<16x32xf32> -> vector<16x32xf32>
    %c0_22 = arith.constant 0 : index
    %c0_23 = arith.constant 0 : index
    %19 = vector.load %arg9[%c0_22, %c0_23] : memref<1x32xf32, #tpu.memory_space<vmem>>, vector<1x32xf32>
    %20 = vector.broadcast %19 : vector<1x32xf32> to vector<16x32xf32>
    %21 = arith.addf %18, %20 : vector<16x32xf32>
    %c0_24 = arith.constant 0 : index
    %c0_25 = arith.constant 0 : index
    %22 = vector.load %arg12[%c0_24, %c0_25] : memref<16x32xf32, #tpu.memory_space<vmem>>, vector<16x32xf32>
    tpu.vector_store %arg12[%c0_24, %c0_25], %21 {strides = array<i32>} : memref<16x32xf32, #tpu.memory_space<vmem>>, vector<16x32xf32>,
    return
  }
  func.func @transform_0(%arg0: i32) -> (i32, i32) {
    %c0_i32 = arith.constant 0 : i32
    %c0_i32_0 = arith.constant 0 : i32
    return %arg0, %c0_i32 : i32, i32
  }
  func.func @transform_1(%arg0: i32) -> (i32, i32) {
    %c0_i32 = arith.constant 0 : i32
    %c0_i32_0 = arith.constant 0 : i32
    return %arg0, %c0_i32 : i32, i32
  }
  func.func @transform_2(%arg0: i32) -> (i32, i32) {
    %c0_i32 = arith.constant 0 : i32
    %c0_i32_0 = arith.constant 0 : i32
    return %arg0, %c0_i32 : i32, i32
  }
  func.func @transform_3(%arg0: i32) -> (i32, i32) {
    %c0_i32 = arith.constant 0 : i32
    %c0_i32_0 = arith.constant 0 : i32
    %c0_i32_1 = arith.constant 0 : i32
    return %c0_i32, %c0_i32_0 : i32, i32
  }
  func.func @transform_4(%arg0: i32) -> (i32, i32) {
    %c0_i32 = arith.constant 0 : i32
    %c0_i32_0 = arith.constant 0 : i32
    %c0_i32_1 = arith.constant 0 : i32
    return %c0_i32, %c0_i32_0 : i32, i32
  }
  func.func @transform_5(%arg0: i32) -> (i32, i32) {
    %c0_i32 = arith.constant 0 : i32
    %c0_i32_0 = arith.constant 0 : i32
    %c0_i32_1 = arith.constant 0 : i32
    return %c0_i32, %c0_i32_0 : i32, i32
  }
  func.func @transform_6(%arg0: i32) -> (i32, i32) {
    %c0_i32 = arith.constant 0 : i32
    %c0_i32_0 = arith.constant 0 : i32
    %c0_i32_1 = arith.constant 0 : i32
    return %c0_i32, %c0_i32_0 : i32, i32
  }
  func.func @transform_7(%arg0: i32) -> (i32, i32) {
    %c0_i32 = arith.constant 0 : i32
    %c0_i32_0 = arith.constant 0 : i32
    %c0_i32_1 = arith.constant 0 : i32
    return %c0_i32, %c0_i32_0 : i32, i32
  }
  func.func @transform_8(%arg0: i32) -> (i32, i32) {
    %c0_i32 = arith.constant 0 : i32
    %c0_i32_0 = arith.constant 0 : i32
    %c0_i32_1 = arith.constant 0 : i32
    return %c0_i32, %c0_i32_0 : i32, i32
  }
  func.func @transform_9(%arg0: i32) -> (i32, i32) {
    %c0_i32 = arith.constant 0 : i32
    %c0_i32_0 = arith.constant 0 : i32
    return %arg0, %c0_i32 : i32, i32
  }
  func.func @transform_10(%arg0: i32) -> (i32, i32) {
    %c0_i32 = arith.constant 0 : i32
    %c0_i32_0 = arith.constant 0 : i32
    return %arg0, %c0_i32 : i32, i32
  }
  func.func @transform_11(%arg0: i32) -> (i32, i32) {
    %c0_i32 = arith.constant 0 : i32
    %c0_i32_0 = arith.constant 0 : i32
    return %arg0, %c0_i32 : i32, i32
  }
}

module attributes {stable_mosaic.version = 11 : i64} {
  func.func @_flash_attn_kernel(%arg0: i32, %arg1: i32, %arg2: i32, %arg3: memref<1x8x8xf32, #tpu.memory_space<vmem>>, %arg4: memref<1x8x8xf32, #tpu.memory_space<vmem>>, %arg5: memref<1x8x8xf32, #tpu.memory_space<vmem>>, %arg6: memref<1x8x8xf32, #tpu.memory_space<vmem>>, %arg7: memref<8x1xf32, #tpu.memory_space<vmem>>, %arg8: memref<8x1xf32, #tpu.memory_space<vmem>>, %arg9: memref<8x8xf32, #tpu.memory_space<vmem>>) attributes {dimension_semantics = [#tpu.dimension_semantics<parallel>, #tpu.dimension_semantics<parallel>, #tpu.dimension_semantics<arbitrary>], iteration_bounds = array<i64: 8, 1, 1>, scalar_prefetch = 0 : i64, scratch_operands = 3 : i64, tpu.core_type = #tpu.core_type<tc>, window_params = [{transform_indices = @transform_0, window_bounds = array<i64: 1, 8, 8>}, {transform_indices = @transform_1, window_bounds = array<i64: 1, 8, 8>}, {transform_indices = @transform_2, window_bounds = array<i64: 1, 8, 8>}, {transform_indices = @transform_3, window_bounds = array<i64: 1, 8, 8>}]} {
    %c0_i32 = arith.constant 0 : i32
    %0 = arith.cmpi eq, %arg2, %c0_i32 : i32
    %1 = arith.extui %0 : i1 to i32
    %c0_i32_0 = arith.constant 0 : i32
    %2 = arith.cmpi ne, %1, %c0_i32_0 : i32
    scf.if %2 {
      %cst_26 = arith.constant 0xFF800000 : f32
      %35 = vector.broadcast %cst_26 : f32 to vector<8x1xf32>
      %c0_27 = arith.constant 0 : index
      %c0_28 = arith.constant 0 : index
      %36 = vector.load %arg7[%c0_27, %c0_28] : memref<8x1xf32, #tpu.memory_space<vmem>>, vector<8x1xf32>
      tpu.vector_store %arg7[%c0_27, %c0_28], %35 {strides = array<i32>} : memref<8x1xf32, #tpu.memory_space<vmem>>, vector<8x1xf32>,
      %cst_29 = arith.constant 0.000000e+00 : f32
      %37 = vector.broadcast %cst_29 : f32 to vector<8x1xf32>
      %c0_30 = arith.constant 0 : index
      %c0_31 = arith.constant 0 : index
      %38 = vector.load %arg8[%c0_30, %c0_31] : memref<8x1xf32, #tpu.memory_space<vmem>>, vector<8x1xf32>
      tpu.vector_store %arg8[%c0_30, %c0_31], %37 {strides = array<i32>} : memref<8x1xf32, #tpu.memory_space<vmem>>, vector<8x1xf32>,
      %cst_32 = arith.constant 0.000000e+00 : f32
      %39 = vector.broadcast %cst_32 : f32 to vector<8x8xf32>
      %c0_33 = arith.constant 0 : index
      %c0_34 = arith.constant 0 : index
      %40 = vector.load %arg9[%c0_33, %c0_34] : memref<8x8xf32, #tpu.memory_space<vmem>>, vector<8x8xf32>
      tpu.vector_store %arg9[%c0_33, %c0_34], %39 {strides = array<i32>} : memref<8x8xf32, #tpu.memory_space<vmem>>, vector<8x8xf32>,
    } else {
    }
    %c0 = arith.constant 0 : index
    %c0_1 = arith.constant 0 : index
    %c0_2 = arith.constant 0 : index
    %3 = vector.load %arg3[%c0, %c0_1, %c0_2] : memref<1x8x8xf32, #tpu.memory_space<vmem>>, vector<1x8x8xf32>
    %4 = vector.shape_cast %3 : vector<1x8x8xf32> to vector<8x8xf32>
    %c0_3 = arith.constant 0 : index
    %c0_4 = arith.constant 0 : index
    %c0_5 = arith.constant 0 : index
    %5 = vector.load %arg4[%c0_3, %c0_4, %c0_5] : memref<1x8x8xf32, #tpu.memory_space<vmem>>, vector<1x8x8xf32>
    %6 = vector.shape_cast %5 : vector<1x8x8xf32> to vector<8x8xf32>
    %cst = arith.constant dense<0.000000e+00> : vector<8x8xf32>
    %7 = tpu.matmul %4, %6, %cst {dimension_numbers = #tpu.dot_dimension_numbers<[1], [1], [0], [0], [0, 0, 1, 0], [], []>} : vector<8x8xf32>, vector<8x8xf32>, vector<8x8xf32> -> vector<8x8xf32>
    %c0_6 = arith.constant 0 : index
    %c0_7 = arith.constant 0 : index
    %8 = vector.load %arg7[%c0_6, %c0_7] : memref<8x1xf32, #tpu.memory_space<vmem>>, vector<8x1xf32>
    %cst_8 = arith.constant dense<0xFF800000> : vector<8xf32>
    %9 = vector.multi_reduction <maximumf>, %7, %cst_8 [1] : vector<8x8xf32> to vector<8xf32>
    %10 = vector.shape_cast %9 : vector<8xf32> to vector<8x1xf32>
    %11 = arith.maximumf %8, %10 : vector<8x1xf32>
    %12 = arith.subf %8, %11 : vector<8x1xf32>
    %13 = math.exp %12 : vector<8x1xf32>
    %14 = vector.broadcast %11 : vector<8x1xf32> to vector<8x8xf32>
    %15 = arith.subf %7, %14 : vector<8x8xf32>
    %16 = math.exp %15 : vector<8x8xf32>
    %c0_9 = arith.constant 0 : index
    %c0_10 = arith.constant 0 : index
    %17 = vector.load %arg8[%c0_9, %c0_10] : memref<8x1xf32, #tpu.memory_space<vmem>>, vector<8x1xf32>
    %18 = arith.mulf %13, %17 : vector<8x1xf32>
    %cst_11 = arith.constant dense<0.000000e+00> : vector<8xf32>
    %19 = vector.multi_reduction <add>, %16, %cst_11 [1] : vector<8x8xf32> to vector<8xf32>
    %20 = vector.shape_cast %19 : vector<8xf32> to vector<8x1xf32>
    %21 = arith.addf %18, %20 : vector<8x1xf32>
    %c0_12 = arith.constant 0 : index
    %c0_13 = arith.constant 0 : index
    %22 = vector.load %arg8[%c0_12, %c0_13] : memref<8x1xf32, #tpu.memory_space<vmem>>, vector<8x1xf32>
    tpu.vector_store %arg8[%c0_12, %c0_13], %21 {strides = array<i32>} : memref<8x1xf32, #tpu.memory_space<vmem>>, vector<8x1xf32>,
    %c0_14 = arith.constant 0 : index
    %c0_15 = arith.constant 0 : index
    %23 = vector.load %arg9[%c0_14, %c0_15] : memref<8x8xf32, #tpu.memory_space<vmem>>, vector<8x8xf32>
    %24 = vector.broadcast %13 : vector<8x1xf32> to vector<8x8xf32>
    %25 = arith.mulf %24, %23 : vector<8x8xf32>
    %c0_16 = arith.constant 0 : index
    %c0_17 = arith.constant 0 : index
    %c0_18 = arith.constant 0 : index
    %26 = vector.load %arg5[%c0_16, %c0_17, %c0_18] : memref<1x8x8xf32, #tpu.memory_space<vmem>>, vector<1x8x8xf32>
    %27 = vector.shape_cast %26 : vector<1x8x8xf32> to vector<8x8xf32>
    %cst_19 = arith.constant dense<0.000000e+00> : vector<8x8xf32>
    %28 = tpu.matmul %16, %27, %cst_19 {dimension_numbers = #tpu.dot_dimension_numbers<[1], [0], [0], [1], [0, 0, 1, 1], [], []>} : vector<8x8xf32>, vector<8x8xf32>, vector<8x8xf32> -> vector<8x8xf32>
    %29 = arith.addf %25, %28 : vector<8x8xf32>
    %c0_20 = arith.constant 0 : index
    %c0_21 = arith.constant 0 : index
    %30 = vector.load %arg9[%c0_20, %c0_21] : memref<8x8xf32, #tpu.memory_space<vmem>>, vector<8x8xf32>
    tpu.vector_store %arg9[%c0_20, %c0_21], %29 {strides = array<i32>} : memref<8x8xf32, #tpu.memory_space<vmem>>, vector<8x8xf32>,
    %c0_22 = arith.constant 0 : index
    %c0_23 = arith.constant 0 : index
    %31 = vector.load %arg7[%c0_22, %c0_23] : memref<8x1xf32, #tpu.memory_space<vmem>>, vector<8x1xf32>
    tpu.vector_store %arg7[%c0_22, %c0_23], %11 {strides = array<i32>} : memref<8x1xf32, #tpu.memory_space<vmem>>, vector<8x1xf32>,
    %c0_i32_24 = arith.constant 0 : i32
    %32 = arith.cmpi eq, %arg2, %c0_i32_24 : i32
    %33 = arith.extui %32 : i1 to i32
    %c0_i32_25 = arith.constant 0 : i32
    %34 = arith.cmpi ne, %33, %c0_i32_25 : i32
    scf.if %34 {
      %c0_26 = arith.constant 0 : index
      %c0_27 = arith.constant 0 : index
      %35 = vector.load %arg8[%c0_26, %c0_27] : memref<8x1xf32, #tpu.memory_space<vmem>>, vector<8x1xf32>
      %36 = tpu.reciprocal %35 {approx = true} : vector<8x1xf32> -> vector<8x1xf32>
      %c0_28 = arith.constant 0 : index
      %c0_29 = arith.constant 0 : index
      %37 = vector.load %arg9[%c0_28, %c0_29] : memref<8x8xf32, #tpu.memory_space<vmem>>, vector<8x8xf32>
      %38 = vector.broadcast %36 : vector<8x1xf32> to vector<8x8xf32>
      %39 = arith.mulf %37, %38 : vector<8x8xf32>
      %c0_30 = arith.constant 0 : index
      %c0_31 = arith.constant 0 : index
      %c0_32 = arith.constant 0 : index
      %40 = vector.load %arg6[%c0_30, %c0_31, %c0_32] : memref<1x8x8xf32, #tpu.memory_space<vmem>>, vector<1x8x8xf32>
      %41 = vector.shape_cast %40 : vector<1x8x8xf32> to vector<8x8xf32>
      %42 = vector.shape_cast %39 : vector<8x8xf32> to vector<1x8x8xf32>
      tpu.vector_store %arg6[%c0_30, %c0_31, %c0_32], %42 {strides = array<i32>} : memref<1x8x8xf32, #tpu.memory_space<vmem>>, vector<1x8x8xf32>,
    } else {
    }
    return
  }
  func.func @transform_0(%arg0: i32, %arg1: i32, %arg2: i32) -> (i32, i32, i32) {
    %c0_i32 = arith.constant 0 : i32
    %c0_i32_0 = arith.constant 0 : i32
    return %arg0, %arg1, %c0_i32 : i32, i32, i32
  }
  func.func @transform_1(%arg0: i32, %arg1: i32, %arg2: i32) -> (i32, i32, i32) {
    %c0_i32 = arith.constant 0 : i32
    %c0_i32_0 = arith.constant 0 : i32
    return %arg0, %arg2, %c0_i32 : i32, i32, i32
  }
  func.func @transform_2(%arg0: i32, %arg1: i32, %arg2: i32) -> (i32, i32, i32) {
    %c0_i32 = arith.constant 0 : i32
    %c0_i32_0 = arith.constant 0 : i32
    return %arg0, %arg2, %c0_i32 : i32, i32, i32
  }
  func.func @transform_3(%arg0: i32, %arg1: i32, %arg2: i32) -> (i32, i32, i32) {
    %c0_i32 = arith.constant 0 : i32
    %c0_i32_0 = arith.constant 0 : i32
    return %arg0, %arg1, %c0_i32 : i32, i32, i32
  }
}

</mosaic_0001>

<llo_original>
// kernel: multi_head_attention.3
$region0: #{multi_head_attention.3}
  #allocation0 [shape = 'u32[]', space=smem, size = 0x4, offset = 0x4, fixed_abs, tag = 'smem constant byte address 0x4 - core index']
  #allocation1 [shape = 'u32[144,128]{1,0:T(1,128)}', space=vmem, size = 0x12000, scoped, tag = 'internal scratch']
  #allocation2 [shape = 'f32[8,1]{1,0:T(8,128)}', space=vmem, size = 0x1000, scoped, tag = 'scratch operand']
  #allocation3 [shape = 'f32[8,1]{1,0:T(8,128)}', space=vmem, size = 0x1000, scoped, tag = 'scratch operand']
  #allocation4 [shape = 'f32[8,8]{1,0:T(8,128)}', space=vmem, size = 0x1000, scoped, tag = 'scratch operand']
  %s0 = inlined_call_operand.vmem [shape: f32[8,8,8], index: 0, kind: input, shape index: {}]
  %s1 = inlined_call_operand.vmem [shape: f32[8,8,8], index: 1, kind: input, shape index: {}]
  %s2 = inlined_call_operand.vmem [shape: f32[8,8,8], index: 2, kind: input, shape index: {}]
  %s3 = inlined_call_operand.vmem [shape: f32[8,8,8], index: 3, kind: output, shape index: {}]
  %s4 = sld [smem:[#allocation0]]
  $region53: #{multi_head_attention.3} parent=0
    _
  %s6 = ssub.s32 1, %s4
  %s7 = scalar_select 0, %s6, %s4
  loop: start=0, step=1, limit=10
  $region2: #{multi_head_attention.3} parent=0 // loop_pre_header
    _
  $region3: #{multi_head_attention.3} parent=0 // loop_header
    %s9 = sphi 0, %s13
    %p10 = scmp.ge.s32.totalorder %s9, 10
    %s16 = sphi 0, %s35
    %s17 = sphi 0, %s31
    %s18 = sphi 0, %s27
    %s19 = sphi 0, %s16
    %s20 = sphi 0, %s17
    %s21 = sphi 0, %s18
    %s22 = sphi 0, %s19
    %s23 = sphi 0, %s20
    %s24 = sphi 0, %s21
    %s40 = sphi 0, %s42
    %s43 = sphi 0, %s40
    %s44 = sphi 0, %s43
    %s60 = sphi 0, %s44
    %s68 = sphi 0, %s70
    %s71 = sphi 0, %s68
    %s72 = sphi 0, %s71
    %s88 = sphi 0, %s72
    %s96 = sphi 0, %s98
    %s99 = sphi 0, %s96
    %s100 = sphi 0, %s99
    %s116 = sphi 0, %s100
    %s124 = sphi 0, %s126
    %s127 = sphi 0, %s124
    %s128 = sphi 0, %s127
    %s144 = sphi 0, %s128
  $region4: #{multi_head_attention.3} parent=0 // loop_header_branch
    %12 = sbr.rel (%p10) target = $region8
  $region5: #{multi_head_attention.3} parent=0 // loop_body
    %s14 = ssub.s32 %s9, 1
    %s15 = ssub.s32 %s9, 2
    %s25 = sadd.s32 1, %s18
    %p26 = scmp.ge.s32.totalorder %s25, 1
    %s27 = scalar_select %p26, 0, %s25
    %s28 = sadd.s32 1, %s17
    %s29 = scalar_select %p26, %s28, %s17
    %p30 = scmp.ge.s32.totalorder %s29, 1
    %s31 = scalar_select %p30, 0, %s29
    %s32 = sadd.s32 1, %s16
    %s33 = scalar_select %p30, %s32, %s16
    %p34 = scmp.ge.s32.totalorder %s33, 8
    %s35 = scalar_select %p34, 0, %s33
    %s36 = ssub.s32 %s16, %s35
    %s37 = ssub.s32 %s17, %s31
    %s38 = sor.u32 %s36, %s37
    %p39 = scmp.eq.s32.totalorder %s38, 0
    %s41 = sadd.s32 %s40, 1
    %s42 = scalar_select %p39, %s40, %s41
    %p45 = pneg %p39
    %p46 = scmp.eq.s32.totalorder %s9, 7
    %p47 = por %p45, %p46
    %p48 = scmp.ne.s32.totalorder %s40, %s43
    %p49 = scmp.eq.s32.totalorder %s9, 0
    %p50 = por %p48, %p49
    %p51 = scmp.ne.s32.totalorder %s40, %s43
    %p52 = scmp.eq.s32.totalorder %s14, 7
    %p53 = por %p51, %p52
    %p54 = scmp.ne.s32.totalorder %s43, %s44
    %p55 = scmp.eq.s32.totalorder %s14, 0
    %p56 = por %p54, %p55
    %p57 = scmp.ne.s32.totalorder %s43, %s44
    %p58 = scmp.eq.s32.totalorder %s15, 7
    %p59 = por %p57, %p58
    %p61 = scmp.ne.s32.totalorder %s44, %s60
    %p62 = scmp.eq.s32.totalorder %s15, 0
    %p63 = por %p61, %p62
    %s64 = ssub.s32 %s16, %s35
    %s65 = ssub.s32 %s18, %s27
    %s66 = sor.u32 %s64, %s65
    %p67 = scmp.eq.s32.totalorder %s66, 0
    %s69 = sadd.s32 %s68, 1
    %s70 = scalar_select %p67, %s68, %s69
    %p73 = pneg %p67
    %p74 = scmp.eq.s32.totalorder %s9, 7
    %p75 = por %p73, %p74
    %p76 = scmp.ne.s32.totalorder %s68, %s71
    %p77 = scmp.eq.s32.totalorder %s9, 0
    %p78 = por %p76, %p77
    %p79 = scmp.ne.s32.totalorder %s68, %s71
    %p80 = scmp.eq.s32.totalorder %s14, 7
    %p81 = por %p79, %p80
    %p82 = scmp.ne.s32.totalorder %s71, %s72
    %p83 = scmp.eq.s32.totalorder %s14, 0
    %p84 = por %p82, %p83
    %p85 = scmp.ne.s32.totalorder %s71, %s72
    %p86 = scmp.eq.s32.totalorder %s15, 7
    %p87 = por %p85, %p86
    %p89 = scmp.ne.s32.totalorder %s72, %s88
    %p90 = scmp.eq.s32.totalorder %s15, 0
    %p91 = por %p89, %p90
    %s92 = ssub.s32 %s16, %s35
    %s93 = ssub.s32 %s18, %s27
    %s94 = sor.u32 %s92, %s93
    %p95 = scmp.eq.s32.totalorder %s94, 0
    %s97 = sadd.s32 %s96, 1
    %s98 = scalar_select %p95, %s96, %s97
    %p101 = pneg %p95
    %p102 = scmp.eq.s32.totalorder %s9, 7
    %p103 = por %p101, %p102
    %p104 = scmp.ne.s32.totalorder %s96, %s99
    %p105 = scmp.eq.s32.totalorder %s9, 0
    %p106 = por %p104, %p105
    %p107 = scmp.ne.s32.totalorder %s96, %s99
    %p108 = scmp.eq.s32.totalorder %s14, 7
    %p109 = por %p107, %p108
    %p110 = scmp.ne.s32.totalorder %s99, %s100
    %p111 = scmp.eq.s32.totalorder %s14, 0
    %p112 = por %p110, %p111
    %p113 = scmp.ne.s32.totalorder %s99, %s100
    %p114 = scmp.eq.s32.totalorder %s15, 7
    %p115 = por %p113, %p114
    %p117 = scmp.ne.s32.totalorder %s100, %s116
    %p118 = scmp.eq.s32.totalorder %s15, 0
    %p119 = por %p117, %p118
    %s120 = ssub.s32 %s16, %s35
    %s121 = ssub.s32 %s17, %s31
    %s122 = sor.u32 %s120, %s121
    %p123 = scmp.eq.s32.totalorder %s122, 0
    %s125 = sadd.s32 %s124, 1
    %s126 = scalar_select %p123, %s124, %s125
    %p129 = pneg %p123
    %p130 = scmp.eq.s32.totalorder %s9, 7
    %p131 = por %p129, %p130
    %p132 = scmp.ne.s32.totalorder %s124, %s127
    %p133 = scmp.eq.s32.totalorder %s9, 0
    %p134 = por %p132, %p133
    %p135 = scmp.ne.s32.totalorder %s124, %s127
    %p136 = scmp.eq.s32.totalorder %s14, 7
    %p137 = por %p135, %p136
    %p138 = scmp.ne.s32.totalorder %s127, %s128
    %p139 = scmp.eq.s32.totalorder %s14, 0
    %p140 = por %p138, %p139
    %p141 = scmp.ne.s32.totalorder %s127, %s128
    %p142 = scmp.eq.s32.totalorder %s15, 7
    %p143 = por %p141, %p142
    %p145 = scmp.ne.s32.totalorder %s128, %s144
    %p146 = scmp.eq.s32.totalorder %s15, 0
    %p147 = por %p145, %p146
    %p148 = scmp.le.s32.totalorder 1, %s9
    %p149 = scmp.lt.s32.totalorder %s9, 9
    %p150 = pnand %p148, %p149
    %p151 = pneg %p150
    // Predicated region
    $region9: #{multi_head_attention.3} parent=5 // pred_check
      _
    $region10: #{multi_head_attention.3} parent=5 // pred_check_branch
      %153 = sbr.rel (%p150) target = $region12
    $region11: #{multi_head_attention.3} parent=5 // pred_region
      %s154 = ssub.s32 %s9, 1
    $region12: #{multi_head_attention.3} parent=5 // pred_fallthru
      _
    %p155 = scmp.lt.s32.totalorder %s9, 8
    // Predicated region
    $region13: #{multi_head_attention.3} parent=5 // pred_check
      %p156 = pneg %p155
    $region14: #{multi_head_attention.3} parent=5 // pred_check_branch
      %158 = sbr.rel (%p156) target = $region16
    $region15: #{multi_head_attention.3} parent=5 // pred_region
      // Predicated region
      $region17: #{multi_head_attention.3} parent=15 // pred_check
        %p159 = pneg %p50
      $region18: #{multi_head_attention.3} parent=15 // pred_check_branch
        %161 = sbr.rel (%p159) target = $region20
      $region19: #{multi_head_attention.3} parent=15 // pred_region
        %p162 = scmp.lt.s32.totalorder %s16, 7
        %s163 = scalar_select %p162, %s16, 7
        %p164 = scmp.lt.s32.totalorder %s17, 0
        %s165 = scalar_select %p164, %s17, 0
        %s166 = sadd.s32 %s165, %s163
        %s167 = smul.addr %s166, 8
        %s168 = scalar_lea.vmem %s0, %s167
      $region20: #{multi_head_attention.3} parent=15 // pred_fallthru
        _
      // Predicated region
      $region21: #{multi_head_attention.3} parent=15 // pred_check
        %p169 = pneg %p78
      $region22: #{multi_head_attention.3} parent=15 // pred_check_branch
        %171 = sbr.rel (%p169) target = $region24
      $region23: #{multi_head_attention.3} parent=15 // pred_region
        %p172 = scmp.lt.s32.totalorder %s16, 7
        %s173 = scalar_select %p172, %s16, 7
        %p174 = scmp.lt.s32.totalorder %s18, 0
        %s175 = scalar_select %p174, %s18, 0
        %s176 = sadd.s32 %s175, %s173
        %s177 = smul.addr %s176, 8
        %s178 = scalar_lea.vmem %s1, %s177
      $region24: #{multi_head_attention.3} parent=15 // pred_fallthru
        _
      // Predicated region
      $region25: #{multi_head_attention.3} parent=15 // pred_check
        %p179 = pneg %p106
      $region26: #{multi_head_attention.3} parent=15 // pred_check_branch
        %181 = sbr.rel (%p179) target = $region28
      $region27: #{multi_head_attention.3} parent=15 // pred_region
        %p182 = scmp.lt.s32.totalorder %s16, 7
        %s183 = scalar_select %p182, %s16, 7
        %p184 = scmp.lt.s32.totalorder %s18, 0
        %s185 = scalar_select %p184, %s18, 0
        %s186 = sadd.s32 %s185, %s183
        %s187 = smul.addr %s186, 8
        %s188 = scalar_lea.vmem %s2, %s187
      $region28: #{multi_head_attention.3} parent=15 // pred_fallthru
        _
    $region16: #{multi_head_attention.3} parent=5 // pred_fallthru
      _
    %p189 = scmp.le.s32.totalorder 1, %s9
    %p190 = scmp.lt.s32.totalorder %s9, 9
    %p191 = pnand %p189, %p190
    %p192 = pneg %p191
    // Predicated region
    $region29: #{multi_head_attention.3} parent=5 // pred_check
      _
    $region30: #{multi_head_attention.3} parent=5 // pred_check_branch
      %194 = sbr.rel (%p191) target = $region32
    $region31: #{multi_head_attention.3} parent=5 // pred_region
      %s195 = ssub.s32 %s9, 1
      %p196 = scmp.lt.s32.totalorder %s19, 7
      %s197 = scalar_select %p196, %s19, 7
      %p198 = scmp.lt.s32.totalorder %s20, 0
      %s199 = scalar_select %p198, %s20, 0
      %s200 = sadd.s32 %s199, %s197
      %s201 = smul.addr %s200, 8
      %s202 = scalar_lea.vmem %s0, %s201
      %p203 = pneg %p56
      %p204 = pneg %p53
      %p205 = scmp.lt.s32.totalorder %s19, 7
      %s206 = scalar_select %p205, %s19, 7
      %p207 = scmp.lt.s32.totalorder %s21, 0
      %s208 = scalar_select %p207, %s21, 0
      %s209 = sadd.s32 %s208, %s206
      %s210 = smul.addr %s209, 8
      %s211 = scalar_lea.vmem %s1, %s210
      %p212 = pneg %p84
      %p213 = pneg %p81
      %p214 = scmp.lt.s32.totalorder %s19, 7
      %s215 = scalar_select %p214, %s19, 7
      %p216 = scmp.lt.s32.totalorder %s21, 0
      %s217 = scalar_select %p216, %s21, 0
      %s218 = sadd.s32 %s217, %s215
      %s219 = smul.addr %s218, 8
      %s220 = scalar_lea.vmem %s2, %s219
      %p221 = pneg %p112
      %p222 = pneg %p109
      %p223 = pneg %p140
      %p224 = pneg %p137
      %p225 = scmp.lt.s32.totalorder %s19, 7
      %s226 = scalar_select %p225, %s19, 7
      %p227 = scmp.lt.s32.totalorder %s20, 0
      %s228 = scalar_select %p227, %s20, 0
      %s229 = sadd.s32 %s228, %s226
      %s230 = smul.addr %s229, 8
      %s231 = scalar_lea.vmem %s3, %s230
      %p232 = scmp.lt.s32.totalorder %s19, 7
      %s233 = scalar_select %p232, %s19, 7
      %p234 = scmp.lt.s32.totalorder %s20, 0
      %s235 = scalar_select %p234, %s20, 0
      %s236 = sadd.s32 %s235, %s233
      %s237 = smul.addr %s236, 8
      %s238 = scalar_lea.vmem %s0, %s237
      %p239 = scmp.lt.s32.totalorder %s19, 7
      %s240 = scalar_select %p239, %s19, 7
      %p241 = scmp.lt.s32.totalorder %s21, 0
      %s242 = scalar_select %p241, %s21, 0
      %s243 = sadd.s32 %s242, %s240
      %s244 = smul.addr %s243, 8
      %s245 = scalar_lea.vmem %s1, %s244
      %p246 = scmp.lt.s32.totalorder %s19, 7
      %s247 = scalar_select %p246, %s19, 7
      %p248 = scmp.lt.s32.totalorder %s21, 0
      %s249 = scalar_select %p248, %s21, 0
      %s250 = sadd.s32 %s249, %s247
      %s251 = smul.addr %s250, 8
      %s252 = scalar_lea.vmem %s2, %s251
      %p253 = scmp.lt.s32.totalorder %s19, 7
      %s254 = scalar_select %p253, %s19, 7
      %p255 = scmp.lt.s32.totalorder %s20, 0
      %s256 = scalar_select %p255, %s20, 0
      %s257 = sadd.s32 %s256, %s254
      %s258 = smul.addr %s257, 8
      %s259 = scalar_lea.vmem %s3, %s258
      %p260 = scmp.eq.s32.totalorder %s21, 0
      // Predicated region
      $region33: #{multi_head_attention.3} parent=31 // pred_check
        %p261 = pneg %p260
      $region34: #{multi_head_attention.3} parent=31 // pred_check_branch
        %263 = sbr.rel (%p261) target = $region36
      $region35: #{multi_head_attention.3} parent=31 // pred_region
        %vm264 = vcmask 7168
        %265 = vst.msk [vmem:[#allocation2] sm:$0xff] %vm264, -inf
        %266 = vst.msk [vmem:[#allocation3] sm:$0xff] %vm264, 0.0
        %vm267 = vcmask 64512
        %268 = vst.msk [vmem:[#allocation4] sm:$0xff] %vm267, 0.0
      $region36: #{multi_head_attention.3} parent=31 // pred_fallthru
        _
      %v269 = vld [vmem:[%s238] sm:$0xff]
      %v270 = vld [vmem:[%s245] sm:$0xff]
      %vm271 = vcmask 64512
      %v273 = vsel %vm271, %v269, 0
      %v276 = vsel %vm271, %v270, 0
      %278 = vmatprep.subr.mxu0 0.0
      %279 = vmatpush1.xpose.msra.mxu0 %v276
      %280 = vmatprep.subr.mxu0 0.0
      %281 = vmatpush1.xpose.msra.mxu0 0.0
      %282 = vmatprep.subr.mxu0 0.0
      %283 = vmatpush1.xpose.msra.mxu0 0.0
      %284 = vmatprep.subr.mxu0 0.0
      %285 = vmatpush1.xpose.msra.mxu0 0.0
      %286 = vmatprep.subr.mxu0 0.0
      %287 = vmatpush1.xpose.msra.mxu0 0.0
      %288 = vmatprep.subr.mxu0 0.0
      %289 = vmatpush1.xpose.msra.mxu0 0.0
      %290 = vmatprep.subr.mxu0 0.0
      %291 = vmatpush1.xpose.msra.mxu0 0.0
      %292 = vmatprep.subr.mxu0 0.0
      %293 = vmatpush1.xpose.msra.mxu0 0.0
      %294 = vmatprep.subr.mxu0 0.0
      %295 = vmatpush1.xpose.msra.mxu0 0.0
      %296 = vmatprep.subr.mxu0 0.0
      %297 = vmatpush1.xpose.msra.mxu0 0.0
      %298 = vmatprep.subr.mxu0 0.0
      %299 = vmatpush1.xpose.msra.mxu0 0.0
      %300 = vmatprep.subr.mxu0 0.0
      %301 = vmatpush1.xpose.msra.mxu0 0.0
      %302 = vmatprep.subr.mxu0 0.0
      %303 = vmatpush1.xpose.msra.mxu0 0.0
      %304 = vmatprep.subr.mxu0 0.0
      %305 = vmatpush1.xpose.msra.mxu0 0.0
      %306 = vmatprep.subr.mxu0 0.0
      %307 = vmatpush1.xpose.msra.mxu0 0.0
      %308 = vmatprep.subr.mxu0 0.0
      %309 = vmatpush1.xpose.msra.mxu0 0.0
      %310 = vmatprep.subr.mxu0 0.0
      %311 = vmatpush1.xpose.msra.mxu0 0.0
      %312 = vmatprep.subr.mxu0 0.0
      %313 = vmatpush1.xpose.msra.mxu0 0.0
      %314 = vmatprep.subr.mxu0 0.0
      %315 = vmatpush1.xpose.msra.mxu0 0.0
      %316 = vmatprep.subr.mxu0 0.0
      %317 = vmatpush1.xpose.msra.mxu0 0.0
      %318 = vmatprep.subr.mxu0 0.0
      %319 = vmatpush1.xpose.msra.mxu0 0.0
      %320 = vmatprep.subr.mxu0 0.0
      %321 = vmatpush1.xpose.msra.mxu0 0.0
      %322 = vmatprep.subr.mxu0 0.0
      %323 = vmatpush1.xpose.msra.mxu0 0.0
      %324 = vmatprep.subr.mxu0 0.0
      %325 = vmatpush1.xpose.msra.mxu0 0.0
      %326 = vmatprep.subr.mxu0 0.0
      %327 = vmatpush1.xpose.msra.mxu0 0.0
      %328 = vmatprep.subr.mxu0 0.0
      %329 = vmatpush1.xpose.msra.mxu0 0.0
      %330 = vmatprep.subr.mxu0 0.0
      %331 = vmatpush1.xpose.msra.mxu0 0.0
      %332 = vmatprep.subr.mxu0 0.0
      %333 = vmatpush1.xpose.msra.mxu0 0.0
      %334 = vmatprep.subr.mxu0 0.0
      %335 = vmatpush1.xpose.msra.mxu0 0.0
      %336 = vmatprep.subr.mxu0 0.0
      %337 = vmatpush1.xpose.msra.mxu0 0.0
      %338 = vmatprep.subr.mxu0 0.0
      %339 = vmatpush1.xpose.msra.mxu0 0.0
      %340 = vmatprep.subr.mxu0 0.0
      %341 = vmatpush1.xpose.msra.mxu0 0.0
      %342 = vmatprep.mubr.f32.mxu0 0.0
      %343 = vmatmul.mubr.f32.gmra.mrb[0].mxu0 %v273
      %v344 = vpop.f32.mrb[0].mxu0
      %v345 = vadd.f32 0.0, %v344
      %v346 = vpop.f32.mrb[0].mxu0
      %347 = vdwg.mxu0
      %v348 = vld [vmem:[#allocation2] sm:$0xff]
      %v349 = vsel %vm271, %v345, -inf
      %350 = vmax.xlane.f32.xlu0 %v349
      %v351 = vpop.xlane.xlu0 %350
      %v352 = vmax.f32 %v348, %v351
      %v353 = vsub.f32 %v348, %v352
      %v354 = vmul.f32 %v353, 1.442695
      %v355 = vpow.pop %v354
      %357 = vset.pattern.permute.xlu0 0
      %358 = vperm.xlu0 %357, %v352
      %v359 = vpop.permute.xlu0 %358
      %v361 = vsub.f32 %v345, %v359
      %v362 = vmul.f32 %v361, 1.442695
      %v363 = vpow.pop %v362
      %v364 = vld [vmem:[#allocation3] sm:$0xff]
      %v365 = vmul.f32 %v355, %v364
      %v366 = vsel %vm271, %v363, 0.0
      %367 = vadd.xlane.f32.xlu0 %v366
      %v368 = vpop.xlane.xlu0 %367
      %v369 = vadd.f32 %v365, %v368
      %vm370 = vcmask 7168
      %371 = vst.msk [vmem:[#allocation3] sm:$0xff] %vm370, %v369
      %v372 = vld [vmem:[#allocation4] sm:$0xff]
      %374 = vset.pattern.permute.xlu0 0
      %375 = vperm.xlu0 %374, %v355
      %v376 = vpop.permute.xlu0 %375
      %v378 = vmul.f32 %v376, %v372
      %v379 = vld [vmem:[%s252] sm:$0xff]
      %v381 = vsel %vm271, %v363, 0
      %383 = vmatprep.subr.mxu0 0.0
      %384 = vmatpush1.msra.mxu0 %v379
      %385 = vmatprep.subr.mxu0 0.0
      %386 = vmatpush1.msra.mxu0 0.0
      %387 = vmatprep.subr.mxu0 0.0
      %388 = vmatpush1.msra.mxu0 0.0
      %389 = vmatprep.subr.mxu0 0.0
      %390 = vmatpush1.msra.mxu0 0.0
      %391 = vmatprep.subr.mxu0 0.0
      %392 = vmatpush1.msra.mxu0 0.0
      %393 = vmatprep.subr.mxu0 0.0
      %394 = vmatpush1.msra.mxu0 0.0
      %395 = vmatprep.subr.mxu0 0.0
      %396 = vmatpush1.msra.mxu0 0.0
      %397 = vmatprep.subr.mxu0 0.0
      %398 = vmatpush1.msra.mxu0 0.0
      %399 = vmatprep.subr.mxu0 0.0
      %400 = vmatpush1.msra.mxu0 0.0
      %401 = vmatprep.subr.mxu0 0.0
      %402 = vmatpush1.msra.mxu0 0.0
      %403 = vmatprep.subr.mxu0 0.0
      %404 = vmatpush1.msra.mxu0 0.0
      %405 = vmatprep.subr.mxu0 0.0
      %406 = vmatpush1.msra.mxu0 0.0
      %407 = vmatprep.subr.mxu0 0.0
      %408 = vmatpush1.msra.mxu0 0.0
      %409 = vmatprep.subr.mxu0 0.0
      %410 = vmatpush1.msra.mxu0 0.0
      %411 = vmatprep.subr.mxu0 0.0
      %412 = vmatpush1.msra.mxu0 0.0
      %413 = vmatprep.subr.mxu0 0.0
      %414 = vmatpush1.msra.mxu0 0.0
      %415 = vmatprep.subr.mxu0 0.0
      %416 = vmatpush1.msra.mxu0 0.0
      %417 = vmatprep.subr.mxu0 0.0
      %418 = vmatpush1.msra.mxu0 0.0
      %419 = vmatprep.subr.mxu0 0.0
      %420 = vmatpush1.msra.mxu0 0.0
      %421 = vmatprep.subr.mxu0 0.0
      %422 = vmatpush1.msra.mxu0 0.0
      %423 = vmatprep.subr.mxu0 0.0
      %424 = vmatpush1.msra.mxu0 0.0
      %425 = vmatprep.subr.mxu0 0.0
      %426 = vmatpush1.msra.mxu0 0.0
      %427 = vmatprep.subr.mxu0 0.0
      %428 = vmatpush1.msra.mxu0 0.0
      %429 = vmatprep.subr.mxu0 0.0
      %430 = vmatpush1.msra.mxu0 0.0
      %431 = vmatprep.subr.mxu0 0.0
      %432 = vmatpush1.msra.mxu0 0.0
      %433 = vmatprep.subr.mxu0 0.0
      %434 = vmatpush1.msra.mxu0 0.0
      %435 = vmatprep.subr.mxu0 0.0
      %436 = vmatpush1.msra.mxu0 0.0
      %437 = vmatprep.subr.mxu0 0.0
      %438 = vmatpush1.msra.mxu0 0.0
      %439 = vmatprep.subr.mxu0 0.0
      %440 = vmatpush1.msra.mxu0 0.0
      %441 = vmatprep.subr.mxu0 0.0
      %442 = vmatpush1.msra.mxu0 0.0
      %443 = vmatprep.subr.mxu0 0.0
      %444 = vmatpush1.msra.mxu0 0.0
      %445 = vmatprep.subr.mxu0 0.0
      %446 = vmatpush1.msra.mxu0 0.0
      %447 = vmatprep.mubr.f32.mxu0 0.0
      %448 = vmatmul.mubr.f32.gmra.mrb[0].mxu0 %v381
      %v449 = vpop.f32.mrb[0].mxu0
      %v450 = vadd.f32 0.0, %v449
      %v451 = vpop.f32.mrb[0].mxu0
      %452 = vdwg.mxu0
      %v453 = vadd.f32 %v378, %v450
      %454 = vst.msk [vmem:[#allocation4] sm:$0xff] %vm271, %v453
      %455 = vst.msk [vmem:[#allocation2] sm:$0xff] %vm370, %v352
      // Predicated region
      $region37: #{multi_head_attention.3} parent=31 // pred_check
        %p456 = pneg %p260
      $region38: #{multi_head_attention.3} parent=31 // pred_check_branch
        %458 = sbr.rel (%p456) target = $region40
      $region39: #{multi_head_attention.3} parent=31 // pred_region
        %v459 = vld [vmem:[#allocation3] sm:$0xff]
        %v460 = vrcp.pop %v459
        %v461 = vld [vmem:[#allocation4] sm:$0xff]
        %463 = vset.pattern.permute.xlu0 0
        %464 = vperm.xlu0 %463, %v460
        %v465 = vpop.permute.xlu0 %464
        %v467 = vmul.f32 %v461, %v465
        %468 = vst.msk [vmem:[%s259] sm:$0xff] %vm271, %v467
      $region40: #{multi_head_attention.3} parent=31 // pred_fallthru
        _
      %p469 = scmp.lt.s32.totalorder %s19, 7
      %s470 = scalar_select %p469, %s19, 7
      %p471 = scmp.lt.s32.totalorder %s20, 0
      %s472 = scalar_select %p471, %s20, 0
      %s473 = sadd.s32 %s472, %s470
      %s474 = smul.addr %s473, 8
      %s475 = scalar_lea.vmem %s3, %s474
      // Predicated region
      $region41: #{multi_head_attention.3} parent=31 // pred_check
        %p476 = pneg %p137
      $region42: #{multi_head_attention.3} parent=31 // pred_check_branch
        %478 = sbr.rel (%p476) target = $region44
      $region43: #{multi_head_attention.3} parent=31 // pred_region
        _
      $region44: #{multi_head_attention.3} parent=31 // pred_fallthru
        _
    $region32: #{multi_head_attention.3} parent=5 // pred_fallthru
      _
    %p479 = scmp.le.s32.totalorder 2, %s9
    // Predicated region
    $region45: #{multi_head_attention.3} parent=5 // pred_check
      %p480 = pneg %p479
    $region46: #{multi_head_attention.3} parent=5 // pred_check_branch
      %482 = sbr.rel (%p480) target = $region48
    $region47: #{multi_head_attention.3} parent=5 // pred_region
      %s483 = ssub.s32 %s9, 2
      // Predicated region
      $region49: #{multi_head_attention.3} parent=47 // pred_check
        %p484 = pneg %p143
      $region50: #{multi_head_attention.3} parent=47 // pred_check_branch
        %486 = sbr.rel (%p484) target = $region52
      $region51: #{multi_head_attention.3} parent=47 // pred_region
        %p487 = scmp.lt.s32.totalorder %s22, 7
        %s488 = scalar_select %p487, %s22, 7
        %p489 = scmp.lt.s32.totalorder %s23, 0
        %s490 = scalar_select %p489, %s23, 0
        %s491 = sadd.s32 %s490, %s488
        %s492 = smul.addr %s491, 8
        %s493 = scalar_lea.vmem %s3, %s492
      $region52: #{multi_head_attention.3} parent=47 // pred_fallthru
        _
    $region48: #{multi_head_attention.3} parent=5 // pred_fallthru
      _
  $region6: #{multi_head_attention.3} parent=0 // loop_footer
    %s13 = sadd.s32 1, %s9
  $region7: #{multi_head_attention.3} parent=0 // loop_footer_branch
    %8 = sbr.rel target = $region3
  $region8: #{multi_head_attention.3} parent=0 // loop_exit
    _

// kernel: multi_head_attention.2
$region0: #{multi_head_attention.2}
  #allocation0 [shape = 'u32[]', space=smem, size = 0x4, offset = 0x4, fixed_abs, tag = 'smem constant byte address 0x4 - core index']
  #allocation1 [shape = 'u32[144,128]{1,0:T(1,128)}', space=vmem, size = 0x12000, scoped, tag = 'internal scratch']
  %s0 = inlined_call_operand.hbm [shape: f32[16,32], index: 0, kind: input, shape index: {}]
  %s1 = inlined_call_operand.hbm [shape: f32[16,32], index: 1, kind: input, shape index: {}]
  %s2 = inlined_call_operand.hbm [shape: f32[16,32], index: 2, kind: input, shape index: {}]
  %s3 = inlined_call_operand.vmem [shape: f32[32,32], index: 3, kind: input, shape index: {}]
  %s4 = inlined_call_operand.hbm [shape: f32[32,32], index: 4, kind: input, shape index: {}]
  %s5 = inlined_call_operand.hbm [shape: f32[32,32], index: 5, kind: input, shape index: {}]
  %s6 = inlined_call_operand.vmem [shape: f32[1,32], index: 6, kind: input, shape index: {}]
  %s7 = inlined_call_operand.vmem [shape: f32[1,32], index: 7, kind: input, shape index: {}]
  %s8 = inlined_call_operand.vmem [shape: f32[1,32], index: 8, kind: input, shape index: {}]
  %s9 = inlined_call_operand.vmem [shape: f32[16,32], index: 9, kind: output, shape index: {0}]
  %s10 = inlined_call_operand.vmem [shape: f32[16,32], index: 10, kind: output, shape index: {1}]
  %s11 = inlined_call_operand.vmem [shape: f32[16,32], index: 11, kind: output, shape index: {2}]
  %12 = xla_tuple %s9, %s10, %s11
  %s13 = sld [smem:[#allocation0]]
  $region82: #{multi_head_attention.2} parent=0
    _
  %s15 = ssub.s32 1, %s13
  %s16 = scalar_select 0, %s15, %s13
  $region1: #{multi_head_attention.2} parent=0
    #allocation2 [shape = 'u8[8192]{0}', space=vmem, size = 0x2000, scoped, tag = 'input window, operand 0, single buffered']
    #allocation3 [shape = 's32[1]{0}', space=sflag, size = 0x4, scoped, tag = 'scoped memory for multi_head_attention.2']
    #allocation4 [shape = 'u8[8192]{0}', space=vmem, size = 0x2000, scoped, tag = 'input window, operand 1, single buffered']
    #allocation5 [shape = 's32[1]{0}', space=sflag, size = 0x4, scoped, tag = 'scoped memory for multi_head_attention.2']
    #allocation6 [shape = 'u8[8192]{0}', space=vmem, size = 0x2000, scoped, tag = 'input window, operand 2, single buffered']
    #allocation7 [shape = 'u8[16384]{0}', space=vmem, size = 0x4000, scoped, tag = 'input window, operand 4, single buffered']
    #allocation8 [shape = 's32[1]{0}', space=sflag, size = 0x4, scoped, tag = 'scoped memory for multi_head_attention.2']
    #allocation9 [shape = 'u8[16384]{0}', space=vmem, size = 0x4000, scoped, tag = 'input window, operand 5, single buffered']
    %17 = vsyncpa [#allocation3], 0
    %18 = vsyncpa [#allocation5], 0
    %19 = vsyncpa [#allocation8], 0
    // Predicated region
    $region2: #{multi_head_attention.2} parent=1 // pred_check
      _
    $region3: #{multi_head_attention.2} parent=1 // pred_check_branch
      %21 = sbr.rel (0) target = $region5
    $region4: #{multi_head_attention.2} parent=1 // pred_region
      %s23 = ssub.s32 256, 256
      %24 = vsyncadd [#allocation3], %s23
      %s25 = sshll.u32 [#allocation2], 4
      %s26 = int_to_ptr.vmem [resolvable:$true] %s25
      %31 = dma.hbm_to_vmem [thread:$0]  %s0, 256, %s26, [#allocation3], 128, 128, 8
    $region5: #{multi_head_attention.2} parent=1 // pred_fallthru
      _
    // Predicated region
    $region6: #{multi_head_attention.2} parent=1 // pred_check
      _
    $region7: #{multi_head_attention.2} parent=1 // pred_check_branch
      %33 = sbr.rel (0) target = $region9
    $region8: #{multi_head_attention.2} parent=1 // pred_region
      %s35 = ssub.s32 256, 256
      %36 = vsyncadd [#allocation5], %s35
      %s37 = sshll.u32 [#allocation4], 4
      %s38 = int_to_ptr.vmem [resolvable:$true] %s37
      %43 = dma.hbm_to_vmem [thread:$0]  %s1, 256, %s38, [#allocation5], 128, 128, 8
    $region9: #{multi_head_attention.2} parent=1 // pred_fallthru
      _
    // Predicated region
    $region10: #{multi_head_attention.2} parent=1 // pred_check
      _
    $region11: #{multi_head_attention.2} parent=1 // pred_check_branch
      %45 = sbr.rel (0) target = $region13
    $region12: #{multi_head_attention.2} parent=1 // pred_region
      %s47 = ssub.s32 256, 256
      %48 = vsyncadd [#allocation5], %s47
      %s49 = sshll.u32 [#allocation6], 4
      %s50 = int_to_ptr.vmem [resolvable:$true] %s49
      %55 = dma.hbm_to_vmem [thread:$0]  %s2, 256, %s50, [#allocation5], 128, 128, 8
    $region13: #{multi_head_attention.2} parent=1 // pred_fallthru
      _
    // Predicated region
    $region14: #{multi_head_attention.2} parent=1 // pred_check
      _
    $region15: #{multi_head_attention.2} parent=1 // pred_check_branch
      %57 = sbr.rel (0) target = $region17
    $region16: #{multi_head_attention.2} parent=1 // pred_region
      _
    $region17: #{multi_head_attention.2} parent=1 // pred_fallthru
      _
    // Predicated region
    $region18: #{multi_head_attention.2} parent=1 // pred_check
      _
    $region19: #{multi_head_attention.2} parent=1 // pred_check_branch
      %59 = sbr.rel (0) target = $region21
    $region20: #{multi_head_attention.2} parent=1 // pred_region
      %s61 = ssub.s32 512, 512
      %62 = vsyncadd [#allocation8], %s61
      %s63 = sshll.u32 [#allocation7], 4
      %s64 = int_to_ptr.vmem [resolvable:$true] %s63
      %69 = dma.hbm_to_vmem [thread:$0]  %s4, 512, %s64, [#allocation8], 128, 128, 8
    $region21: #{multi_head_attention.2} parent=1 // pred_fallthru
      _
    // Predicated region
    $region22: #{multi_head_attention.2} parent=1 // pred_check
      _
    $region23: #{multi_head_attention.2} parent=1 // pred_check_branch
      %71 = sbr.rel (0) target = $region25
    $region24: #{multi_head_attention.2} parent=1 // pred_region
      %s73 = ssub.s32 512, 512
      %74 = vsyncadd [#allocation8], %s73
      %s75 = sshll.u32 [#allocation9], 4
      %s76 = int_to_ptr.vmem [resolvable:$true] %s75
      %81 = dma.hbm_to_vmem [thread:$0]  %s5, 512, %s76, [#allocation8], 128, 128, 8
    $region25: #{multi_head_attention.2} parent=1 // pred_fallthru
      _
    // Predicated region
    $region26: #{multi_head_attention.2} parent=1 // pred_check
      _
    $region27: #{multi_head_attention.2} parent=1 // pred_check_branch
      %83 = sbr.rel (0) target = $region29
    $region28: #{multi_head_attention.2} parent=1 // pred_region
      _
    $region29: #{multi_head_attention.2} parent=1 // pred_fallthru
      _
    // Predicated region
    $region30: #{multi_head_attention.2} parent=1 // pred_check
      _
    $region31: #{multi_head_attention.2} parent=1 // pred_check_branch
      %85 = sbr.rel (0) target = $region33
    $region32: #{multi_head_attention.2} parent=1 // pred_region
      _
    $region33: #{multi_head_attention.2} parent=1 // pred_fallthru
      _
    // Predicated region
    $region34: #{multi_head_attention.2} parent=1 // pred_check
      _
    $region35: #{multi_head_attention.2} parent=1 // pred_check_branch
      %87 = sbr.rel (0) target = $region37
    $region36: #{multi_head_attention.2} parent=1 // pred_region
      _
    $region37: #{multi_head_attention.2} parent=1 // pred_fallthru
      _
    // Predicated region
    $region38: #{multi_head_attention.2} parent=1 // pred_check
      _
    $region39: #{multi_head_attention.2} parent=1 // pred_check_branch
      %89 = sbr.rel (0) target = $region41
    $region40: #{multi_head_attention.2} parent=1 // pred_region
      %90 = dma.done [#allocation3], 256
    $region41: #{multi_head_attention.2} parent=1 // pred_fallthru
      _
    // Predicated region
    $region42: #{multi_head_attention.2} parent=1 // pred_check
      _
    $region43: #{multi_head_attention.2} parent=1 // pred_check_branch
      %92 = sbr.rel (0) target = $region45
    $region44: #{multi_head_attention.2} parent=1 // pred_region
      %93 = dma.done [#allocation5], 256
    $region45: #{multi_head_attention.2} parent=1 // pred_fallthru
      _
    // Predicated region
    $region46: #{multi_head_attention.2} parent=1 // pred_check
      _
    $region47: #{multi_head_attention.2} parent=1 // pred_check_branch
      %95 = sbr.rel (0) target = $region49
    $region48: #{multi_head_attention.2} parent=1 // pred_region
      %96 = dma.done [#allocation5], 256
    $region49: #{multi_head_attention.2} parent=1 // pred_fallthru
      _
    // Predicated region
    $region50: #{multi_head_attention.2} parent=1 // pred_check
      _
    $region51: #{multi_head_attention.2} parent=1 // pred_check_branch
      %98 = sbr.rel (0) target = $region53
    $region52: #{multi_head_attention.2} parent=1 // pred_region
      %99 = dma.done [#allocation8], 512
    $region53: #{multi_head_attention.2} parent=1 // pred_fallthru
      _
    // Predicated region
    $region54: #{multi_head_attention.2} parent=1 // pred_check
      _
    $region55: #{multi_head_attention.2} parent=1 // pred_check_branch
      %101 = sbr.rel (0) target = $region57
    $region56: #{multi_head_attention.2} parent=1 // pred_region
      %102 = dma.done [#allocation8], 512
    $region57: #{multi_head_attention.2} parent=1 // pred_fallthru
      _
    %v103 = vld [vmem:[#allocation2] sm:$0xff]
    %v104 = vld [vmem:[#allocation2 + $0x8] sm:$0xff]
    %v105 = vld [vmem:[%s3] sm:$0xff]
    %v106 = vld [vmem:[%s3 + $0x8] sm:$0xff]
    %v107 = vld [vmem:[%s3 + $0x10] sm:$0xff]
    %v108 = vld [vmem:[%s3 + $0x18] sm:$0xff]
    %v109 = vld [vmem:[%s6] sm:$0x1]
    %v111 = vlaneseq
    %v112 = vshrl.u32 %v111, 7
    %v113 = vsub.s32 0, %v112
    %v114 = vrot.slane %v109, %v113
    %vm116 = vcmask 261120
    %v118 = vsel %vm116, %v103, 0
    %v121 = vsel %vm116, %v104, 0
    %123 = vmatprep.subr.mxu0 0.0
    %124 = vmatpush1.msra.mxu0 %v105
    %125 = vmatprep.subr.mxu0 0.0
    %126 = vmatpush1.msra.mxu0 %v106
    %127 = vmatprep.subr.mxu0 0.0
    %128 = vmatpush1.msra.mxu0 %v107
    %129 = vmatprep.subr.mxu0 0.0
    %130 = vmatpush1.msra.mxu0 %v108
    %131 = vmatprep.subr.mxu0 0.0
    %132 = vmatpush1.msra.mxu0 0.0
    %133 = vmatprep.subr.mxu0 0.0
    %134 = vmatpush1.msra.mxu0 0.0
    %135 = vmatprep.subr.mxu0 0.0
    %136 = vmatpush1.msra.mxu0 0.0
    %137 = vmatprep.subr.mxu0 0.0
    %138 = vmatpush1.msra.mxu0 0.0
    %139 = vmatprep.subr.mxu0 0.0
    %140 = vmatpush1.msra.mxu0 0.0
    %141 = vmatprep.subr.mxu0 0.0
    %142 = vmatpush1.msra.mxu0 0.0
    %143 = vmatprep.subr.mxu0 0.0
    %144 = vmatpush1.msra.mxu0 0.0
    %145 = vmatprep.subr.mxu0 0.0
    %146 = vmatpush1.msra.mxu0 0.0
    %147 = vmatprep.subr.mxu0 0.0
    %148 = vmatpush1.msra.mxu0 0.0
    %149 = vmatprep.subr.mxu0 0.0
    %150 = vmatpush1.msra.mxu0 0.0
    %151 = vmatprep.subr.mxu0 0.0
    %152 = vmatpush1.msra.mxu0 0.0
    %153 = vmatprep.subr.mxu0 0.0
    %154 = vmatpush1.msra.mxu0 0.0
    %155 = vmatprep.subr.mxu0 0.0
    %156 = vmatpush1.msra.mxu0 0.0
    %157 = vmatprep.subr.mxu0 0.0
    %158 = vmatpush1.msra.mxu0 0.0
    %159 = vmatprep.subr.mxu0 0.0
    %160 = vmatpush1.msra.mxu0 0.0
    %161 = vmatprep.subr.mxu0 0.0
    %162 = vmatpush1.msra.mxu0 0.0
    %163 = vmatprep.subr.mxu0 0.0
    %164 = vmatpush1.msra.mxu0 0.0
    %165 = vmatprep.subr.mxu0 0.0
    %166 = vmatpush1.msra.mxu0 0.0
    %167 = vmatprep.subr.mxu0 0.0
    %168 = vmatpush1.msra.mxu0 0.0
    %169 = vmatprep.subr.mxu0 0.0
    %170 = vmatpush1.msra.mxu0 0.0
    %171 = vmatprep.subr.mxu0 0.0
    %172 = vmatpush1.msra.mxu0 0.0
    %173 = vmatprep.subr.mxu0 0.0
    %174 = vmatpush1.msra.mxu0 0.0
    %175 = vmatprep.subr.mxu0 0.0
    %176 = vmatpush1.msra.mxu0 0.0
    %177 = vmatprep.subr.mxu0 0.0
    %178 = vmatpush1.msra.mxu0 0.0
    %179 = vmatprep.subr.mxu0 0.0
    %180 = vmatpush1.msra.mxu0 0.0
    %181 = vmatprep.subr.mxu0 0.0
    %182 = vmatpush1.msra.mxu0 0.0
    %183 = vmatprep.subr.mxu0 0.0
    %184 = vmatpush1.msra.mxu0 0.0
    %185 = vmatprep.subr.mxu0 0.0
    %186 = vmatpush1.msra.mxu0 0.0
    %187 = vmatprep.mubr.f32.mxu0 0.0
    %188 = vmatmul.mubr.f32.gmra.mrb[0].mxu0 %v118
    %v189 = vpop.f32.mrb[0].mxu0
    %v190 = vadd.f32 %v114, %v189
    %v191 = vpop.f32.mrb[0].mxu0
    %192 = vmatprep.mubr.f32.mxu0 0.0
    %193 = vmatmul.mubr.f32.gmra.mrb[0].mxu0 %v121
    %v194 = vpop.f32.mrb[0].mxu0
    %v195 = vadd.f32 %v114, %v194
    %v196 = vpop.f32.mrb[0].mxu0
    %197 = vdwg.mxu0
    %v198 = vmul.f32 %v190, 0.35355338
    %v199 = vmul.f32 %v195, 0.35355338
    %200 = vst.msk [vmem:[%s9] sm:$0xff] %vm116, %v198
    %201 = vst.msk [vmem:[%s9 + $0x8] sm:$0xff] %vm116, %v199
    %v202 = vld [vmem:[#allocation4] sm:$0xff]
    %v203 = vld [vmem:[#allocation4 + $0x8] sm:$0xff]
    %v204 = vld [vmem:[#allocation7] sm:$0xff]
    %v205 = vld [vmem:[#allocation7 + $0x8] sm:$0xff]
    %v206 = vld [vmem:[#allocation7 + $0x10] sm:$0xff]
    %v207 = vld [vmem:[#allocation7 + $0x18] sm:$0xff]
    %v208 = vld [vmem:[%s7] sm:$0x1]
    %v210 = vlaneseq
    %v211 = vshrl.u32 %v210, 7
    %v212 = vsub.s32 0, %v211
    %v213 = vrot.slane %v208, %v212
    %v216 = vsel %vm116, %v202, 0
    %v219 = vsel %vm116, %v203, 0
    %221 = vmatprep.subr.mxu0 0.0
    %222 = vmatpush1.msra.mxu0 %v204
    %223 = vmatprep.subr.mxu0 0.0
    %224 = vmatpush1.msra.mxu0 %v205
    %225 = vmatprep.subr.mxu0 0.0
    %226 = vmatpush1.msra.mxu0 %v206
    %227 = vmatprep.subr.mxu0 0.0
    %228 = vmatpush1.msra.mxu0 %v207
    %229 = vmatprep.subr.mxu0 0.0
    %230 = vmatpush1.msra.mxu0 0.0
    %231 = vmatprep.subr.mxu0 0.0
    %232 = vmatpush1.msra.mxu0 0.0
    %233 = vmatprep.subr.mxu0 0.0
    %234 = vmatpush1.msra.mxu0 0.0
    %235 = vmatprep.subr.mxu0 0.0
    %236 = vmatpush1.msra.mxu0 0.0
    %237 = vmatprep.subr.mxu0 0.0
    %238 = vmatpush1.msra.mxu0 0.0
    %239 = vmatprep.subr.mxu0 0.0
    %240 = vmatpush1.msra.mxu0 0.0
    %241 = vmatprep.subr.mxu0 0.0
    %242 = vmatpush1.msra.mxu0 0.0
    %243 = vmatprep.subr.mxu0 0.0
    %244 = vmatpush1.msra.mxu0 0.0
    %245 = vmatprep.subr.mxu0 0.0
    %246 = vmatpush1.msra.mxu0 0.0
    %247 = vmatprep.subr.mxu0 0.0
    %248 = vmatpush1.msra.mxu0 0.0
    %249 = vmatprep.subr.mxu0 0.0
    %250 = vmatpush1.msra.mxu0 0.0
    %251 = vmatprep.subr.mxu0 0.0
    %252 = vmatpush1.msra.mxu0 0.0
    %253 = vmatprep.subr.mxu0 0.0
    %254 = vmatpush1.msra.mxu0 0.0
    %255 = vmatprep.subr.mxu0 0.0
    %256 = vmatpush1.msra.mxu0 0.0
    %257 = vmatprep.subr.mxu0 0.0
    %258 = vmatpush1.msra.mxu0 0.0
    %259 = vmatprep.subr.mxu0 0.0
    %260 = vmatpush1.msra.mxu0 0.0
    %261 = vmatprep.subr.mxu0 0.0
    %262 = vmatpush1.msra.mxu0 0.0
    %263 = vmatprep.subr.mxu0 0.0
    %264 = vmatpush1.msra.mxu0 0.0
    %265 = vmatprep.subr.mxu0 0.0
    %266 = vmatpush1.msra.mxu0 0.0
    %267 = vmatprep.subr.mxu0 0.0
    %268 = vmatpush1.msra.mxu0 0.0
    %269 = vmatprep.subr.mxu0 0.0
    %270 = vmatpush1.msra.mxu0 0.0
    %271 = vmatprep.subr.mxu0 0.0
    %272 = vmatpush1.msra.mxu0 0.0
    %273 = vmatprep.subr.mxu0 0.0
    %274 = vmatpush1.msra.mxu0 0.0
    %275 = vmatprep.subr.mxu0 0.0
    %276 = vmatpush1.msra.mxu0 0.0
    %277 = vmatprep.subr.mxu0 0.0
    %278 = vmatpush1.msra.mxu0 0.0
    %279 = vmatprep.subr.mxu0 0.0
    %280 = vmatpush1.msra.mxu0 0.0
    %281 = vmatprep.subr.mxu0 0.0
    %282 = vmatpush1.msra.mxu0 0.0
    %283 = vmatprep.subr.mxu0 0.0
    %284 = vmatpush1.msra.mxu0 0.0
    %285 = vmatprep.mubr.f32.mxu0 0.0
    %286 = vmatmul.mubr.f32.gmra.mrb[0].mxu0 %v216
    %v287 = vpop.f32.mrb[0].mxu0
    %v288 = vadd.f32 %v213, %v287
    %v289 = vpop.f32.mrb[0].mxu0
    %290 = vmatprep.mubr.f32.mxu0 0.0
    %291 = vmatmul.mubr.f32.gmra.mrb[0].mxu0 %v219
    %v292 = vpop.f32.mrb[0].mxu0
    %v293 = vadd.f32 %v213, %v292
    %v294 = vpop.f32.mrb[0].mxu0
    %295 = vdwg.mxu0
    %296 = vst.msk [vmem:[%s10] sm:$0xff] %vm116, %v288
    %297 = vst.msk [vmem:[%s10 + $0x8] sm:$0xff] %vm116, %v293
    %v298 = vld [vmem:[#allocation6] sm:$0xff]
    %v299 = vld [vmem:[#allocation6 + $0x8] sm:$0xff]
    %v300 = vld [vmem:[#allocation9] sm:$0xff]
    %v301 = vld [vmem:[#allocation9 + $0x8] sm:$0xff]
    %v302 = vld [vmem:[#allocation9 + $0x10] sm:$0xff]
    %v303 = vld [vmem:[#allocation9 + $0x18] sm:$0xff]
    %v304 = vld [vmem:[%s8] sm:$0x1]
    %v306 = vlaneseq
    %v307 = vshrl.u32 %v306, 7
    %v308 = vsub.s32 0, %v307
    %v309 = vrot.slane %v304, %v308
    %v312 = vsel %vm116, %v298, 0
    %v315 = vsel %vm116, %v299, 0
    %317 = vmatprep.subr.mxu0 0.0
    %318 = vmatpush1.msra.mxu0 %v300
    %319 = vmatprep.subr.mxu0 0.0
    %320 = vmatpush1.msra.mxu0 %v301
    %321 = vmatprep.subr.mxu0 0.0
    %322 = vmatpush1.msra.mxu0 %v302
    %323 = vmatprep.subr.mxu0 0.0
    %324 = vmatpush1.msra.mxu0 %v303
    %325 = vmatprep.subr.mxu0 0.0
    %326 = vmatpush1.msra.mxu0 0.0
    %327 = vmatprep.subr.mxu0 0.0
    %328 = vmatpush1.msra.mxu0 0.0
    %329 = vmatprep.subr.mxu0 0.0
    %330 = vmatpush1.msra.mxu0 0.0
    %331 = vmatprep.subr.mxu0 0.0
    %332 = vmatpush1.msra.mxu0 0.0
    %333 = vmatprep.subr.mxu0 0.0
    %334 = vmatpush1.msra.mxu0 0.0
    %335 = vmatprep.subr.mxu0 0.0
    %336 = vmatpush1.msra.mxu0 0.0
    %337 = vmatprep.subr.mxu0 0.0
    %338 = vmatpush1.msra.mxu0 0.0
    %339 = vmatprep.subr.mxu0 0.0
    %340 = vmatpush1.msra.mxu0 0.0
    %341 = vmatprep.subr.mxu0 0.0
    %342 = vmatpush1.msra.mxu0 0.0
    %343 = vmatprep.subr.mxu0 0.0
    %344 = vmatpush1.msra.mxu0 0.0
    %345 = vmatprep.subr.mxu0 0.0
    %346 = vmatpush1.msra.mxu0 0.0
    %347 = vmatprep.subr.mxu0 0.0
    %348 = vmatpush1.msra.mxu0 0.0
    %349 = vmatprep.subr.mxu0 0.0
    %350 = vmatpush1.msra.mxu0 0.0
    %351 = vmatprep.subr.mxu0 0.0
    %352 = vmatpush1.msra.mxu0 0.0
    %353 = vmatprep.subr.mxu0 0.0
    %354 = vmatpush1.msra.mxu0 0.0
    %355 = vmatprep.subr.mxu0 0.0
    %356 = vmatpush1.msra.mxu0 0.0
    %357 = vmatprep.subr.mxu0 0.0
    %358 = vmatpush1.msra.mxu0 0.0
    %359 = vmatprep.subr.mxu0 0.0
    %360 = vmatpush1.msra.mxu0 0.0
    %361 = vmatprep.subr.mxu0 0.0
    %362 = vmatpush1.msra.mxu0 0.0
    %363 = vmatprep.subr.mxu0 0.0
    %364 = vmatpush1.msra.mxu0 0.0
    %365 = vmatprep.subr.mxu0 0.0
    %366 = vmatpush1.msra.mxu0 0.0
    %367 = vmatprep.subr.mxu0 0.0
    %368 = vmatpush1.msra.mxu0 0.0
    %369 = vmatprep.subr.mxu0 0.0
    %370 = vmatpush1.msra.mxu0 0.0
    %371 = vmatprep.subr.mxu0 0.0
    %372 = vmatpush1.msra.mxu0 0.0
    %373 = vmatprep.subr.mxu0 0.0
    %374 = vmatpush1.msra.mxu0 0.0
    %375 = vmatprep.subr.mxu0 0.0
    %376 = vmatpush1.msra.mxu0 0.0
    %377 = vmatprep.subr.mxu0 0.0
    %378 = vmatpush1.msra.mxu0 0.0
    %379 = vmatprep.subr.mxu0 0.0
    %380 = vmatpush1.msra.mxu0 0.0
    %381 = vmatprep.mubr.f32.mxu0 0.0
    %382 = vmatmul.mubr.f32.gmra.mrb[0].mxu0 %v312
    %v383 = vpop.f32.mrb[0].mxu0
    %v384 = vadd.f32 %v309, %v383
    %v385 = vpop.f32.mrb[0].mxu0
    %386 = vmatprep.mubr.f32.mxu0 0.0
    %387 = vmatmul.mubr.f32.gmra.mrb[0].mxu0 %v315
    %v388 = vpop.f32.mrb[0].mxu0
    %v389 = vadd.f32 %v309, %v388
    %v390 = vpop.f32.mrb[0].mxu0
    %391 = vdwg.mxu0
    %392 = vst.msk [vmem:[%s11] sm:$0xff] %vm116, %v384
    %393 = vst.msk [vmem:[%s11 + $0x8] sm:$0xff] %vm116, %v389
    // Predicated region
    $region58: #{multi_head_attention.2} parent=1 // pred_check
      _
    $region59: #{multi_head_attention.2} parent=1 // pred_check_branch
      %395 = sbr.rel (0) target = $region61
    $region60: #{multi_head_attention.2} parent=1 // pred_region
      _
    $region61: #{multi_head_attention.2} parent=1 // pred_fallthru
      _
    // Predicated region
    $region62: #{multi_head_attention.2} parent=1 // pred_check
      _
    $region63: #{multi_head_attention.2} parent=1 // pred_check_branch
      %397 = sbr.rel (0) target = $region65
    $region64: #{multi_head_attention.2} parent=1 // pred_region
      _
    $region65: #{multi_head_attention.2} parent=1 // pred_fallthru
      _
    // Predicated region
    $region66: #{multi_head_attention.2} parent=1 // pred_check
      _
    $region67: #{multi_head_attention.2} parent=1 // pred_check_branch
      %399 = sbr.rel (0) target = $region69
    $region68: #{multi_head_attention.2} parent=1 // pred_region
      _
    $region69: #{multi_head_attention.2} parent=1 // pred_fallthru
      _
    // Predicated region
    $region70: #{multi_head_attention.2} parent=1 // pred_check
      _
    $region71: #{multi_head_attention.2} parent=1 // pred_check_branch
      %401 = sbr.rel (0) target = $region73
    $region72: #{multi_head_attention.2} parent=1 // pred_region
      _
    $region73: #{multi_head_attention.2} parent=1 // pred_fallthru
      _
    // Predicated region
    $region74: #{multi_head_attention.2} parent=1 // pred_check
      _
    $region75: #{multi_head_attention.2} parent=1 // pred_check_branch
      %403 = sbr.rel (0) target = $region77
    $region76: #{multi_head_attention.2} parent=1 // pred_region
      _
    $region77: #{multi_head_attention.2} parent=1 // pred_fallthru
      _
    // Predicated region
    $region78: #{multi_head_attention.2} parent=1 // pred_check
      _
    $region79: #{multi_head_attention.2} parent=1 // pred_check_branch
      %405 = sbr.rel (0) target = $region81
    $region80: #{multi_head_attention.2} parent=1 // pred_region
      _
    $region81: #{multi_head_attention.2} parent=1 // pred_fallthru
      _
    %406 = vsyncpa [#allocation3], 1
    %407 = vsyncpa [#allocation5], 1
    %408 = vsyncpa [#allocation8], 1

</llo_original>
